<compile_context>
chip_gen: v7x
topology: tpu7x:2x2x1
jax: 0.10.0
libtpu: 0.0.40
codegen_flags: <defaults>
</compile_context>

<pallas_src>
import functools

import jax
import jax.numpy as jnp
from jax.experimental import pallas as pl
from jax.experimental.pallas import tpu as pltpu


# ----------------------------- helpers -------------------------------------

def _round_up(x, m):
    return ((x + m - 1) // m) * m


def _plan_tiles(n):
    """Return (n_pad, tm, tk) for the A @ H aggregation grid."""
    if n <= 256:
        # Small graph: one block (full-array dims satisfy the (8,128) rule).
        n_pad = _round_up(n, 8)
        return n_pad, n_pad, n_pad
    # Realistic graph: 256x256 bf16 A tiles, row axis parallel, K axis reduced.
    tm = tk = 256
    return _round_up(n, 256), tm, tk


# ----------------------------- Pallas kernel -------------------------------

def gconv_kernel(a_ref, h_ref, w_ref, b_ref, out_ref, acc_ref, *, activation):
    """One GraphConv layer tile: out = act((A @ H) @ W + b) over a K-reduction."""
    k = pl.program_id(1)

    @pl.when(k == 0)
    def _():
        acc_ref[...] = jnp.zeros_like(acc_ref)

    # Aggregation: bf16 x bf16 on the MXU, f32 accumulation.
    acc_ref[...] += jnp.dot(a_ref[...], h_ref[...],
                            preferred_element_type=jnp.float32)

    @pl.when(k == pl.num_programs(1) - 1)
    def _():
        # Epilogue (once per output tile): feature transform + bias + activation.
        y = jnp.dot(acc_ref[...], w_ref[...],
                    preferred_element_type=jnp.float32) + b_ref[...]
        out_ref[...] = activation(y).astype(out_ref.dtype)


def graphconv_layer(a_pad, h_pad, w, b, activation, out_dtype):
    """act(A @ H @ W + b) with a (row, K)-tiled grid over A.

    a_pad: [n_pad, n_pad] bf16   h_pad: [n_pad, f_in] bf16
    w:     [f_in, f_out]  f32    b:     [1, f_out]    f32   (f_in/f_out = 128k)
    """
    n_pad = a_pad.shape[0]
    f_in = h_pad.shape[1]
    f_out = w.shape[1]
    _, tm, tk = _plan_tiles(n_pad)
    grid = (n_pad // tm, n_pad // tk)

    kernel = functools.partial(gconv_kernel, activation=activation)
    return pl.pallas_call(
        kernel,
        out_shape=jax.ShapeDtypeStruct((n_pad, f_out), out_dtype),
        grid_spec=pltpu.PrefetchScalarGridSpec(
            num_scalar_prefetch=0,
            grid=grid,
            in_specs=[
                pl.BlockSpec((tm, tk), lambda i, k: (i, k)),        # A tile
                pl.BlockSpec((tk, f_in), lambda i, k: (k, 0)),      # H K-slab
                pl.BlockSpec((f_in, f_out), lambda i, k: (0, 0)),   # W (resident)
                pl.BlockSpec((1, f_out), lambda i, k: (0, 0)),      # bias
            ],
            out_specs=pl.BlockSpec((tm, f_out), lambda i, k: (i, 0)),
            scratch_shapes=[pltpu.VMEM((tm, f_in), jnp.float32)],
        ),
        compiler_params=pltpu.CompilerParams(
            dimension_semantics=("parallel", "arbitrary"),
            vmem_limit_bytes=32 * 1024 * 1024,   # explicit: valid on v7x 64 MiB
        ),
    )(a_pad, h_pad, w, b)


# ----------------------------- model forward -------------------------------

def run_gnn(a_pad, x_pad, params):
    relu = lambda y: jnp.maximum(y, 0.0)
    h = graphconv_layer(a_pad, x_pad, params["w1"], params["b1"], relu, jnp.bfloat16)
    h = graphconv_layer(a_pad, h, params["w2"], params["b2"], relu, jnp.bfloat16)
    # one_gnn applies sigmoid on the last GraphConv output.
    g = graphconv_layer(a_pad, h, params["w3"], params["b3"], jax.nn.sigmoid,
                        jnp.float32)
    return g


def one_gnn_forward(a_norm, x, dis, train_idx, params):
    """Forward pass of one_gnn.

    a_norm:    [N, N]  symmetric-normalized dense adjacency (the graph g)
    x:         [N, GNN_in_dim]  node features
    dis:       [N, N]  pairwise distances
    train_idx: tuple (src_idx, dst_idx), each [E] int32
    """
    n = a_norm.shape[0]
    n_pad, _, _ = _plan_tiles(n)
    f_in_pad = _round_up(x.shape[1], 128)

    # Zero-pad graph + features to tile-aligned, lane-dense shapes (bf16 MXU inputs).
    a_pad = jnp.zeros((n_pad, n_pad), jnp.bfloat16)
    a_pad = a_pad.at[:n, :n].set(a_norm.astype(jnp.bfloat16))
    x_pad = jnp.zeros((n_pad, f_in_pad), jnp.bfloat16)
    x_pad = x_pad.at[:n, :x.shape[1]].set(x.astype(jnp.bfloat16))

    emb_dim = (params["w_out"].shape[0] - 1) // 2
    g_emb = run_gnn(a_pad, x_pad, params)[:n, :emb_dim]      # [N, node_embsize]

    # Edge head in plain JAX (tiny, unaligned; a Pallas launch was pure overhead).
    # w_out is split so no [E, 2*emb+1] concat is materialized:
    #   tanh([o | d | dis] @ w_out + b) == tanh(o@w_o + d@w_d + dis*w_dis + b)
    o_emb = g_emb[train_idx[0]]                               # [E, emb]
    d_emb = g_emb[train_idx[1]]                               # [E, emb]
    dis_e = dis[train_idx[0], train_idx[1]][:, None]          # [E, 1]
    w_out = params["w_out"]                                   # [2*emb+1, 1]
    pre = jnp.tanh(o_emb @ w_out[:emb_dim]
                   + d_emb @ w_out[emb_dim:2 * emb_dim]
                   + dis_e * w_out[2 * emb_dim, 0]
                   + params["b_out"])
    return pre                                                # [E, 1]


# ----------------------------- setup / main --------------------------------

def make_params(key, in_dim, hid_dim, emb_dim):
    ks = jax.random.split(key, 5)

    def glorot(k, shape):
        fan_in, fan_out = shape
        lim = (6.0 / (fan_in + fan_out)) ** 0.5
        return jax.random.uniform(k, shape, jnp.float32, -lim, lim)

    def pad2(w):  # zero-pad both dims up to multiples of 128 (lane-dense slabs)
        r, c = _round_up(w.shape[0], 128), _round_up(w.shape[1], 128)
        return jnp.zeros((r, c), jnp.float32).at[:w.shape[0], :w.shape[1]].set(w)

    def pad_bias(f):
        return jnp.zeros((1, _round_up(f, 128)), jnp.float32)

    return {
        "w1": pad2(glorot(ks[0], (in_dim, hid_dim))), "b1": pad_bias(hid_dim),
        "w2": pad2(glorot(ks[1], (hid_dim, hid_dim))), "b2": pad_bias(hid_dim),
        "w3": pad2(glorot(ks[2], (hid_dim, emb_dim))), "b3": pad_bias(emb_dim),
        # nn.Linear(node_embsize*2 + 1, 1) — kept at logical size (head is plain JAX)
        "w_out": glorot(ks[3], (2 * emb_dim + 1, 1)),
        "b_out": jax.random.uniform(ks[4], (1, 1), jnp.float32, -0.1, 0.1),
    }


def make_graph(key, n):
    # random symmetric adjacency (no self-loops), symmetric normalization ('both')
    a = (jax.random.uniform(key, (n, n)) < 0.3).astype(jnp.float32)
    a = jnp.maximum(a, a.T)
    a = a * (1.0 - jnp.eye(n, dtype=jnp.float32))
    deg = jnp.maximum(a.sum(axis=1), 1.0)
    d_inv_sqrt = 1.0 / jnp.sqrt(deg)
    return d_inv_sqrt[:, None] * a * d_inv_sqrt[None, :]


if __name__ == "__main__":
    # config: GNN_in_dim=8, GNN_hid_dim=32, node_embsize=16, E=8 edges
    IN_DIM, HID_DIM, EMB_DIM, E = 8, 32, 16, 8

    key = jax.random.PRNGKey(0)
    k_params, k_rest = jax.random.split(key)
    params = make_params(k_params, IN_DIM, HID_DIM, EMB_DIM)

    fwd = jax.jit(one_gnn_forward)

    # N=16  -> single-block path (toy size matching the spec config)
    # N=640 -> padded to 768, (3,3) grid: exercises the tiled K-reduction path
    for n in (16, 640):
        kg, kx, kd, ksrc, kdst = jax.random.split(jax.random.fold_in(k_rest, n), 5)
        a_norm = make_graph(kg, n)
        x = jax.random.normal(kx, (n, IN_DIM), jnp.float32)
        dis = jax.random.uniform(kd, (n, n), jnp.float32)
        train_idx = (
            jax.random.randint(ksrc, (E,), 0, n, dtype=jnp.int32),
            jax.random.randint(kdst, (E,), 0, n, dtype=jnp.int32),
        )
        pre = fwd(a_norm, x, dis, train_idx, params)
        jax.block_until_ready(pre)
        assert pre.shape == (E, 1)
        assert bool(jnp.all(jnp.isfinite(pre)))

    print("KERNEL_OK")
</pallas_src>

<mosaic_0001>
module attributes {stable_mosaic.version = 11 : i64} {
  func.func @gconv_kernel(%arg0: i32, %arg1: i32, %arg2: memref<16x16xbf16, #tpu.memory_space<vmem>>, %arg3: memref<16x128xbf16, #tpu.memory_space<vmem>>, %arg4: memref<128x128xf32, #tpu.memory_space<vmem>>, %arg5: memref<1x128xf32, #tpu.memory_space<vmem>>, %arg6: memref<16x128xbf16, #tpu.memory_space<vmem>>, %arg7: memref<16x128xf32, #tpu.memory_space<vmem>>) attributes {dimension_semantics = [#tpu.dimension_semantics<parallel>, #tpu.dimension_semantics<arbitrary>], iteration_bounds = array<i64: 1, 1>, scalar_prefetch = 0 : i64, scratch_operands = 1 : i64, tpu.core_type = #tpu.core_type<tc>, window_params = [{transform_indices = @transform_0, window_bounds = array<i64: 16, 16>}, {transform_indices = @transform_1, window_bounds = array<i64: 16, 128>}, {pipeline_mode = #tpu.pipeline_mode<synchronous>, transform_indices = @transform_2, window_bounds = array<i64: 128, 128>}, {pipeline_mode = #tpu.pipeline_mode<synchronous>, transform_indices = @transform_3, window_bounds = array<i64: 1, 128>}, {transform_indices = @transform_4, window_bounds = array<i64: 16, 128>}]} {
    %c0_i32 = arith.constant 0 : i32
    %0 = arith.cmpi eq, %arg1, %c0_i32 : i32
    %1 = arith.extui %0 : i1 to i32
    %c0_i32_0 = arith.constant 0 : i32
    %2 = arith.cmpi ne, %1, %c0_i32_0 : i32
    scf.if %2 {
      %cst_10 = arith.constant 0.000000e+00 : f32
      %12 = vector.broadcast %cst_10 : f32 to vector<16x128xf32>
      %c0_11 = arith.constant 0 : index
      %c0_12 = arith.constant 0 : index
      %13 = vector.load %arg7[%c0_11, %c0_12] : memref<16x128xf32, #tpu.memory_space<vmem>>, vector<16x128xf32>
      tpu.vector_store %arg7[%c0_11, %c0_12], %12 {strides = array<i32>} : memref<16x128xf32, #tpu.memory_space<vmem>>, vector<16x128xf32>,
    } else {
    }
    %c0 = arith.constant 0 : index
    %c0_1 = arith.constant 0 : index
    %3 = vector.load %arg7[%c0, %c0_1] : memref<16x128xf32, #tpu.memory_space<vmem>>, vector<16x128xf32>
    %c0_2 = arith.constant 0 : index
    %c0_3 = arith.constant 0 : index
    %4 = vector.load %arg2[%c0_2, %c0_3] : memref<16x16xbf16, #tpu.memory_space<vmem>>, vector<16x16xbf16>
    %c0_4 = arith.constant 0 : index
    %c0_5 = arith.constant 0 : index
    %5 = vector.load %arg3[%c0_4, %c0_5] : memref<16x128xbf16, #tpu.memory_space<vmem>>, vector<16x128xbf16>
    %cst = arith.constant dense<0.000000e+00> : vector<16x128xf32>
    %6 = tpu.matmul %4, %5, %cst {dimension_numbers = #tpu.dot_dimension_numbers<[1], [0], [0], [1], [0, 0, 1, 1], [], []>} : vector<16x16xbf16>, vector<16x128xbf16>, vector<16x128xf32> -> vector<16x128xf32>
    %7 = arith.addf %3, %6 : vector<16x128xf32>
    %c0_6 = arith.constant 0 : index
    %c0_7 = arith.constant 0 : index
    %8 = vector.load %arg7[%c0_6, %c0_7] : memref<16x128xf32, #tpu.memory_space<vmem>>, vector<16x128xf32>
    tpu.vector_store %arg7[%c0_6, %c0_7], %7 {strides = array<i32>} : memref<16x128xf32, #tpu.memory_space<vmem>>, vector<16x128xf32>,
    %c0_i32_8 = arith.constant 0 : i32
    %9 = arith.cmpi eq, %arg1, %c0_i32_8 : i32
    %10 = arith.extui %9 : i1 to i32
    %c0_i32_9 = arith.constant 0 : i32
    %11 = arith.cmpi ne, %10, %c0_i32_9 : i32
    scf.if %11 {
      %c0_10 = arith.constant 0 : index
      %c0_11 = arith.constant 0 : index
      %12 = vector.load %arg7[%c0_10, %c0_11] : memref<16x128xf32, #tpu.memory_space<vmem>>, vector<16x128xf32>
      %c0_12 = arith.constant 0 : index
      %c0_13 = arith.constant 0 : index
      %13 = vector.load %arg4[%c0_12, %c0_13] : memref<128x128xf32, #tpu.memory_space<vmem>>, vector<128x128xf32>
      %cst_14 = arith.constant dense<0.000000e+00> : vector<16x128xf32>
      %14 = tpu.matmul %12, %13, %cst_14 {dimension_numbers = #tpu.dot_dimension_numbers<[1], [0], [0], [1], [0, 0, 1, 1], [], []>} : vector<16x128xf32>, vector<128x128xf32>, vector<16x128xf32> -> vector<16x128xf32>
      %c0_15 = arith.constant 0 : index
      %c0_16 = arith.constant 0 : index
      %15 = vector.load %arg5[%c0_15, %c0_16] : memref<1x128xf32, #tpu.memory_space<vmem>>, vector<1x128xf32>
      %16 = vector.broadcast %15 : vector<1x128xf32> to vector<16x128xf32>
      %17 = arith.addf %14, %16 : vector<16x128xf32>
      %cst_17 = arith.constant 0.000000e+00 : f32
      %18 = vector.broadcast %cst_17 : f32 to vector<16x128xf32>
      %19 = arith.maximumf %17, %18 : vector<16x128xf32>
      %20 = arith.truncf %19 : vector<16x128xf32> to vector<16x128xbf16>
      %c0_18 = arith.constant 0 : index
      %c0_19 = arith.constant 0 : index
      %21 = vector.load %arg6[%c0_18, %c0_19] : memref<16x128xbf16, #tpu.memory_space<vmem>>, vector<16x128xbf16>
      tpu.vector_store %arg6[%c0_18, %c0_19], %20 {strides = array<i32>} : memref<16x128xbf16, #tpu.memory_space<vmem>>, vector<16x128xbf16>,
    } else {
    }
    return
  }
  func.func @transform_0(%arg0: i32, %arg1: i32) -> (i32, i32) {
    %c0_i32 = arith.constant 0 : i32
    return %arg0, %arg1 : i32, i32
  }
  func.func @transform_1(%arg0: i32, %arg1: i32) -> (i32, i32) {
    %c0_i32 = arith.constant 0 : i32
    %c0_i32_0 = arith.constant 0 : i32
    return %arg1, %c0_i32 : i32, i32
  }
  func.func @transform_2(%arg0: i32, %arg1: i32) -> (i32, i32) {
    %c0_i32 = arith.constant 0 : i32
    %c0_i32_0 = arith.constant 0 : i32
    %c0_i32_1 = arith.constant 0 : i32
    return %c0_i32, %c0_i32_0 : i32, i32
  }
  func.func @transform_3(%arg0: i32, %arg1: i32) -> (i32, i32) {
    %c0_i32 = arith.constant 0 : i32
    %c0_i32_0 = arith.constant 0 : i32
    %c0_i32_1 = arith.constant 0 : i32
    return %c0_i32, %c0_i32_0 : i32, i32
  }
  func.func @transform_4(%arg0: i32, %arg1: i32) -> (i32, i32) {
    %c0_i32 = arith.constant 0 : i32
    %c0_i32_0 = arith.constant 0 : i32
    return %arg0, %c0_i32 : i32, i32
  }
}

module attributes {stable_mosaic.version = 11 : i64} {
  func.func @gconv_kernel(%arg0: i32, %arg1: i32, %arg2: memref<16x16xbf16, #tpu.memory_space<vmem>>, %arg3: memref<16x128xbf16, #tpu.memory_space<vmem>>, %arg4: memref<128x128xf32, #tpu.memory_space<vmem>>, %arg5: memref<1x128xf32, #tpu.memory_space<vmem>>, %arg6: memref<16x128xf32, #tpu.memory_space<vmem>>, %arg7: memref<16x128xf32, #tpu.memory_space<vmem>>) attributes {dimension_semantics = [#tpu.dimension_semantics<parallel>, #tpu.dimension_semantics<arbitrary>], iteration_bounds = array<i64: 1, 1>, scalar_prefetch = 0 : i64, scratch_operands = 1 : i64, tpu.core_type = #tpu.core_type<tc>, window_params = [{transform_indices = @transform_0, window_bounds = array<i64: 16, 16>}, {transform_indices = @transform_1, window_bounds = array<i64: 16, 128>}, {pipeline_mode = #tpu.pipeline_mode<synchronous>, transform_indices = @transform_2, window_bounds = array<i64: 128, 128>}, {pipeline_mode = #tpu.pipeline_mode<synchronous>, transform_indices = @transform_3, window_bounds = array<i64: 1, 128>}, {transform_indices = @transform_4, window_bounds = array<i64: 16, 128>}]} {
    %c0_i32 = arith.constant 0 : i32
    %0 = arith.cmpi eq, %arg1, %c0_i32 : i32
    %1 = arith.extui %0 : i1 to i32
    %c0_i32_0 = arith.constant 0 : i32
    %2 = arith.cmpi ne, %1, %c0_i32_0 : i32
    scf.if %2 {
      %cst_10 = arith.constant 0.000000e+00 : f32
      %12 = vector.broadcast %cst_10 : f32 to vector<16x128xf32>
      %c0_11 = arith.constant 0 : index
      %c0_12 = arith.constant 0 : index
      %13 = vector.load %arg7[%c0_11, %c0_12] : memref<16x128xf32, #tpu.memory_space<vmem>>, vector<16x128xf32>
      tpu.vector_store %arg7[%c0_11, %c0_12], %12 {strides = array<i32>} : memref<16x128xf32, #tpu.memory_space<vmem>>, vector<16x128xf32>,
    } else {
    }
    %c0 = arith.constant 0 : index
    %c0_1 = arith.constant 0 : index
    %3 = vector.load %arg7[%c0, %c0_1] : memref<16x128xf32, #tpu.memory_space<vmem>>, vector<16x128xf32>
    %c0_2 = arith.constant 0 : index
    %c0_3 = arith.constant 0 : index
    %4 = vector.load %arg2[%c0_2, %c0_3] : memref<16x16xbf16, #tpu.memory_space<vmem>>, vector<16x16xbf16>
    %c0_4 = arith.constant 0 : index
    %c0_5 = arith.constant 0 : index
    %5 = vector.load %arg3[%c0_4, %c0_5] : memref<16x128xbf16, #tpu.memory_space<vmem>>, vector<16x128xbf16>
    %cst = arith.constant dense<0.000000e+00> : vector<16x128xf32>
    %6 = tpu.matmul %4, %5, %cst {dimension_numbers = #tpu.dot_dimension_numbers<[1], [0], [0], [1], [0, 0, 1, 1], [], []>} : vector<16x16xbf16>, vector<16x128xbf16>, vector<16x128xf32> -> vector<16x128xf32>
    %7 = arith.addf %3, %6 : vector<16x128xf32>
    %c0_6 = arith.constant 0 : index
    %c0_7 = arith.constant 0 : index
    %8 = vector.load %arg7[%c0_6, %c0_7] : memref<16x128xf32, #tpu.memory_space<vmem>>, vector<16x128xf32>
    tpu.vector_store %arg7[%c0_6, %c0_7], %7 {strides = array<i32>} : memref<16x128xf32, #tpu.memory_space<vmem>>, vector<16x128xf32>,
    %c0_i32_8 = arith.constant 0 : i32
    %9 = arith.cmpi eq, %arg1, %c0_i32_8 : i32
    %10 = arith.extui %9 : i1 to i32
    %c0_i32_9 = arith.constant 0 : i32
    %11 = arith.cmpi ne, %10, %c0_i32_9 : i32
    scf.if %11 {
      %c0_10 = arith.constant 0 : index
      %c0_11 = arith.constant 0 : index
      %12 = vector.load %arg7[%c0_10, %c0_11] : memref<16x128xf32, #tpu.memory_space<vmem>>, vector<16x128xf32>
      %c0_12 = arith.constant 0 : index
      %c0_13 = arith.constant 0 : index
      %13 = vector.load %arg4[%c0_12, %c0_13] : memref<128x128xf32, #tpu.memory_space<vmem>>, vector<128x128xf32>
      %cst_14 = arith.constant dense<0.000000e+00> : vector<16x128xf32>
      %14 = tpu.matmul %12, %13, %cst_14 {dimension_numbers = #tpu.dot_dimension_numbers<[1], [0], [0], [1], [0, 0, 1, 1], [], []>} : vector<16x128xf32>, vector<128x128xf32>, vector<16x128xf32> -> vector<16x128xf32>
      %c0_15 = arith.constant 0 : index
      %c0_16 = arith.constant 0 : index
      %15 = vector.load %arg5[%c0_15, %c0_16] : memref<1x128xf32, #tpu.memory_space<vmem>>, vector<1x128xf32>
      %16 = vector.broadcast %15 : vector<1x128xf32> to vector<16x128xf32>
      %17 = arith.addf %14, %16 : vector<16x128xf32>
      %18 = arith.negf %17 : vector<16x128xf32>
      %19 = math.exp %18 : vector<16x128xf32>
      %cst_17 = arith.constant 1.000000e+00 : f32
      %20 = vector.broadcast %cst_17 : f32 to vector<16x128xf32>
      %21 = arith.addf %20, %19 : vector<16x128xf32>
      %22 = arith.divf %20, %21 : vector<16x128xf32>
      %c0_18 = arith.constant 0 : index
      %c0_19 = arith.constant 0 : index
      %23 = vector.load %arg6[%c0_18, %c0_19] : memref<16x128xf32, #tpu.memory_space<vmem>>, vector<16x128xf32>
      tpu.vector_store %arg6[%c0_18, %c0_19], %22 {strides = array<i32>} : memref<16x128xf32, #tpu.memory_space<vmem>>, vector<16x128xf32>,
    } else {
    }
    return
  }
  func.func @transform_0(%arg0: i32, %arg1: i32) -> (i32, i32) {
    %c0_i32 = arith.constant 0 : i32
    return %arg0, %arg1 : i32, i32
  }
  func.func @transform_1(%arg0: i32, %arg1: i32) -> (i32, i32) {
    %c0_i32 = arith.constant 0 : i32
    %c0_i32_0 = arith.constant 0 : i32
    return %arg1, %c0_i32 : i32, i32
  }
  func.func @transform_2(%arg0: i32, %arg1: i32) -> (i32, i32) {
    %c0_i32 = arith.constant 0 : i32
    %c0_i32_0 = arith.constant 0 : i32
    %c0_i32_1 = arith.constant 0 : i32
    return %c0_i32, %c0_i32_0 : i32, i32
  }
  func.func @transform_3(%arg0: i32, %arg1: i32) -> (i32, i32) {
    %c0_i32 = arith.constant 0 : i32
    %c0_i32_0 = arith.constant 0 : i32
    %c0_i32_1 = arith.constant 0 : i32
    return %c0_i32, %c0_i32_0 : i32, i32
  }
  func.func @transform_4(%arg0: i32, %arg1: i32) -> (i32, i32) {
    %c0_i32 = arith.constant 0 : i32
    %c0_i32_0 = arith.constant 0 : i32
    return %arg0, %c0_i32 : i32, i32
  }
}

</mosaic_0001>

<llo_original>
// kernel: one_gnn_forward.5
$region0: #{one_gnn_forward.5}
  #allocation0 [shape = 'u32[]', space=smem, size = 0x4, offset = 0x4, fixed_abs, tag = 'smem constant byte address 0x4 - core index']
  #allocation1 [shape = 'u32[144,128]{1,0:T(1,128)}', space=vmem, size = 0x12000, scoped, tag = 'internal scratch']
  #allocation2 [shape = 'f32[16,128]{1,0:T(8,128)}', space=vmem, size = 0x2000, scoped, tag = 'scratch operand']
  %s0 = inlined_call_operand.vmem [shape: bf16[16,16], index: 0, kind: input, shape index: {}]
  %s1 = inlined_call_operand.vmem [shape: bf16[16,128], index: 1, kind: input, shape index: {}]
  %s2 = inlined_call_operand.vmem [shape: f32[128,128], index: 2, kind: input, shape index: {}]
  %s3 = inlined_call_operand.vmem [shape: f32[1,128], index: 3, kind: input, shape index: {}]
  %s4 = inlined_call_operand.vmem [shape: f32[16,128], index: 4, kind: output, shape index: {}]
  %s5 = sld [smem:[#allocation0]]
  $region34: #{one_gnn_forward.5} parent=0
    _
  %s7 = ssub.s32 1, %s5
  %s8 = scalar_select 0, %s7, %s5
  // Predicated region
  $region2: #{one_gnn_forward.5} parent=0 // pred_check
    _
  $region3: #{one_gnn_forward.5} parent=0 // pred_check_branch
    %10 = sbr.rel (0) target = $region5
  $region4: #{one_gnn_forward.5} parent=0 // pred_region
    _
  $region5: #{one_gnn_forward.5} parent=0 // pred_fallthru
    _
  // Predicated region
  $region6: #{one_gnn_forward.5} parent=0 // pred_check
    _
  $region7: #{one_gnn_forward.5} parent=0 // pred_check_branch
    %12 = sbr.rel (0) target = $region9
  $region8: #{one_gnn_forward.5} parent=0 // pred_region
    _
  $region9: #{one_gnn_forward.5} parent=0 // pred_fallthru
    _
  // Predicated region
  $region10: #{one_gnn_forward.5} parent=0 // pred_check
    _
  $region11: #{one_gnn_forward.5} parent=0 // pred_check_branch
    %14 = sbr.rel (0) target = $region13
  $region12: #{one_gnn_forward.5} parent=0 // pred_region
    _
  $region13: #{one_gnn_forward.5} parent=0 // pred_fallthru
    _
  // Predicated region
  $region14: #{one_gnn_forward.5} parent=0 // pred_check
    _
  $region15: #{one_gnn_forward.5} parent=0 // pred_check_branch
    %16 = sbr.rel (0) target = $region17
  $region16: #{one_gnn_forward.5} parent=0 // pred_region
    _
  $region17: #{one_gnn_forward.5} parent=0 // pred_fallthru
    _
  %p18 = scmp.eq.s32.totalorder 0, 0
  // Predicated region
  $region18: #{one_gnn_forward.5} parent=0 // pred_check
    %p19 = pneg %p18
  $region19: #{one_gnn_forward.5} parent=0 // pred_check_branch
    %21 = sbr.rel (%p19) target = $region21
  $region20: #{one_gnn_forward.5} parent=0 // pred_region
    %22 = vst [vmem:[#allocation2] sm:$0xff] 0.0
    %23 = vst [vmem:[#allocation2 + $0x8] sm:$0xff] 0.0
  $region21: #{one_gnn_forward.5} parent=0 // pred_fallthru
    _
  %v24 = vld [vmem:[#allocation2] sm:$0xff]
  %v25 = vld [vmem:[#allocation2 + $0x8] sm:$0xff]
  %v26 = vld [vmem:[%s0] sm:$0xf]
  %v27 = vld [vmem:[%s0 + $0x4] sm:$0xf]
  %v28 = vld [vmem:[%s1] sm:$0xf]
  %v29 = vld [vmem:[%s1 + $0x4] sm:$0xf]
  %v32 = vunpack.c.l.b16 %v26
  %v33 = vunpack.c.l.b16 %v27
  %v34 = vpack.c.b16 %v33, %v32
  %v37 = vunpack.c.l.b16 %v28
  %v38 = vunpack.c.l.b16 %v29
  %v39 = vpack.c.b16 %v38, %v37
  %vm41 = vcmask 130048
  %v43 = vsel %vm41, %v34, 0
  %45 = vmatprep.subr.bf16.mxu0 0
  %46 = vmatpush1.bf16.msra.mxu0 %v39
  %47 = vmatprep.subr.bf16.mxu0 0
  %48 = vmatpush1.bf16.msra.mxu0 0
  %49 = vmatprep.subr.bf16.mxu0 0
  %50 = vmatpush1.bf16.msra.mxu0 0
  %51 = vmatprep.subr.bf16.mxu0 0
  %52 = vmatpush1.bf16.msra.mxu0 0
  %53 = vmatprep.subr.bf16.mxu0 0
  %54 = vmatpush1.bf16.msra.mxu0 0
  %55 = vmatprep.subr.bf16.mxu0 0
  %56 = vmatpush1.bf16.msra.mxu0 0
  %57 = vmatprep.subr.bf16.mxu0 0
  %58 = vmatpush1.bf16.msra.mxu0 0
  %59 = vmatprep.subr.bf16.mxu0 0
  %60 = vmatpush1.bf16.msra.mxu0 0
  %61 = vmatprep.subr.bf16.mxu0 0
  %62 = vmatpush1.bf16.msra.mxu0 0
  %63 = vmatprep.subr.bf16.mxu0 0
  %64 = vmatpush1.bf16.msra.mxu0 0
  %65 = vmatprep.subr.bf16.mxu0 0
  %66 = vmatpush1.bf16.msra.mxu0 0
  %67 = vmatprep.subr.bf16.mxu0 0
  %68 = vmatpush1.bf16.msra.mxu0 0
  %69 = vmatprep.subr.bf16.mxu0 0
  %70 = vmatpush1.bf16.msra.mxu0 0
  %71 = vmatprep.subr.bf16.mxu0 0
  %72 = vmatpush1.bf16.msra.mxu0 0
  %73 = vmatprep.subr.bf16.mxu0 0
  %74 = vmatpush1.bf16.msra.mxu0 0
  %75 = vmatprep.subr.bf16.mxu0 0
  %76 = vmatpush1.bf16.msra.mxu0 0
  %77 = vmatprep.mubr.bf16.mxu0 0
  %78 = vmatmul.mubr.bf16.gmra.mrb[0].mxu0 %v43
  %v79 = vpop.f32.mrb[0].mxu0
  %v80 = vadd.f32 0.0, %v79
  %v81 = vpop.f32.mrb[0].mxu0
  %v82 = vpop.f32.mrb[0].mxu0
  %v83 = vadd.f32 0.0, %v82
  %v84 = vpop.f32.mrb[0].mxu0
  %85 = vdwg.mxu0
  %v86 = vadd.f32 %v24, %v80
  %v87 = vadd.f32 %v25, %v83
  %88 = vst [vmem:[#allocation2] sm:$0xff] %v86
  %89 = vst [vmem:[#allocation2 + $0x8] sm:$0xff] %v87
  // Predicated region
  $region22: #{one_gnn_forward.5} parent=0 // pred_check
    %p90 = pneg %p18
  $region23: #{one_gnn_forward.5} parent=0 // pred_check_branch
    %92 = sbr.rel (%p90) target = $region25
  $region24: #{one_gnn_forward.5} parent=0 // pred_region
    %v93 = vld [vmem:[#allocation2] sm:$0xff]
    %v94 = vld [vmem:[#allocation2 + $0x8] sm:$0xff]
    %v95 = vld [vmem:[%s2] sm:$0xff]
    %v96 = vld [vmem:[%s2 + $0x8] sm:$0xff]
    %v97 = vld [vmem:[%s2 + $0x10] sm:$0xff]
    %v98 = vld [vmem:[%s2 + $0x18] sm:$0xff]
    %v99 = vld [vmem:[%s2 + $0x20] sm:$0xff]
    %v100 = vld [vmem:[%s2 + $0x28] sm:$0xff]
    %v101 = vld [vmem:[%s2 + $0x30] sm:$0xff]
    %v102 = vld [vmem:[%s2 + $0x38] sm:$0xff]
    %v103 = vld [vmem:[%s2 + $0x40] sm:$0xff]
    %v104 = vld [vmem:[%s2 + $0x48] sm:$0xff]
    %v105 = vld [vmem:[%s2 + $0x50] sm:$0xff]
    %v106 = vld [vmem:[%s2 + $0x58] sm:$0xff]
    %v107 = vld [vmem:[%s2 + $0x60] sm:$0xff]
    %v108 = vld [vmem:[%s2 + $0x68] sm:$0xff]
    %v109 = vld [vmem:[%s2 + $0x70] sm:$0xff]
    %v110 = vld [vmem:[%s2 + $0x78] sm:$0xff]
    %v111 = vld [vmem:[%s3] sm:$0x1]
    %v113 = vlaneseq
    %v114 = vshrl.u32 %v113, 7
    %v115 = vsub.s32 0, %v114
    %v116 = vrot.slane %v111, %v115
    %118 = vmatprep.subr.mxu0 0.0
    %119 = vmatpush1.msra.mxu0 %v95
    %120 = vmatprep.subr.mxu0 0.0
    %121 = vmatpush1.msra.mxu0 %v96
    %122 = vmatprep.subr.mxu0 0.0
    %123 = vmatpush1.msra.mxu0 %v97
    %124 = vmatprep.subr.mxu0 0.0
    %125 = vmatpush1.msra.mxu0 %v98
    %126 = vmatprep.subr.mxu0 0.0
    %127 = vmatpush1.msra.mxu0 %v99
    %128 = vmatprep.subr.mxu0 0.0
    %129 = vmatpush1.msra.mxu0 %v100
    %130 = vmatprep.subr.mxu0 0.0
    %131 = vmatpush1.msra.mxu0 %v101
    %132 = vmatprep.subr.mxu0 0.0
    %133 = vmatpush1.msra.mxu0 %v102
    %134 = vmatprep.subr.mxu0 0.0
    %135 = vmatpush1.msra.mxu0 %v103
    %136 = vmatprep.subr.mxu0 0.0
    %137 = vmatpush1.msra.mxu0 %v104
    %138 = vmatprep.subr.mxu0 0.0
    %139 = vmatpush1.msra.mxu0 %v105
    %140 = vmatprep.subr.mxu0 0.0
    %141 = vmatpush1.msra.mxu0 %v106
    %142 = vmatprep.subr.mxu0 0.0
    %143 = vmatpush1.msra.mxu0 %v107
    %144 = vmatprep.subr.mxu0 0.0
    %145 = vmatpush1.msra.mxu0 %v108
    %146 = vmatprep.subr.mxu0 0.0
    %147 = vmatpush1.msra.mxu0 %v109
    %148 = vmatprep.subr.mxu0 0.0
    %149 = vmatpush1.msra.mxu0 %v110
    %150 = vmatprep.subr.mxu0 0.0
    %151 = vmatpush1.msra.mxu0 0.0
    %152 = vmatprep.subr.mxu0 0.0
    %153 = vmatpush1.msra.mxu0 0.0
    %154 = vmatprep.subr.mxu0 0.0
    %155 = vmatpush1.msra.mxu0 0.0
    %156 = vmatprep.subr.mxu0 0.0
    %157 = vmatpush1.msra.mxu0 0.0
    %158 = vmatprep.subr.mxu0 0.0
    %159 = vmatpush1.msra.mxu0 0.0
    %160 = vmatprep.subr.mxu0 0.0
    %161 = vmatpush1.msra.mxu0 0.0
    %162 = vmatprep.subr.mxu0 0.0
    %163 = vmatpush1.msra.mxu0 0.0
    %164 = vmatprep.subr.mxu0 0.0
    %165 = vmatpush1.msra.mxu0 0.0
    %166 = vmatprep.subr.mxu0 0.0
    %167 = vmatpush1.msra.mxu0 0.0
    %168 = vmatprep.subr.mxu0 0.0
    %169 = vmatpush1.msra.mxu0 0.0
    %170 = vmatprep.subr.mxu0 0.0
    %171 = vmatpush1.msra.mxu0 0.0
    %172 = vmatprep.subr.mxu0 0.0
    %173 = vmatpush1.msra.mxu0 0.0
    %174 = vmatprep.subr.mxu0 0.0
    %175 = vmatpush1.msra.mxu0 0.0
    %176 = vmatprep.subr.mxu0 0.0
    %177 = vmatpush1.msra.mxu0 0.0
    %178 = vmatprep.subr.mxu0 0.0
    %179 = vmatpush1.msra.mxu0 0.0
    %180 = vmatprep.subr.mxu0 0.0
    %181 = vmatpush1.msra.mxu0 0.0
    %182 = vmatprep.mubr.f32.mxu0 0.0
    %183 = vmatmul.mubr.f32.gmra.mrb[0].mxu0 %v93
    %v184 = vpop.f32.mrb[0].mxu0
    %v185 = vadd.f32 %v116, %v184
    %v186 = vpop.f32.mrb[0].mxu0
    %187 = vmatprep.mubr.f32.mxu0 0.0
    %188 = vmatmul.mubr.f32.gmra.mrb[0].mxu0 %v94
    %v189 = vpop.f32.mrb[0].mxu0
    %v190 = vadd.f32 %v116, %v189
    %v191 = vpop.f32.mrb[0].mxu0
    %192 = vdwg.mxu0
    %v193 = vxor.u32 %v185, 2147483648
    %v194 = vxor.u32 %v190, 2147483648
    %v195 = vmul.f32 %v193, 1.442695
    %v196 = vpow.pop %v195
    %v197 = vmul.f32 %v194, 1.442695
    %v198 = vpow.pop %v197
    %v199 = vadd.f32 %v196, 1.0
    %v200 = vadd.f32 %v198, 1.0
    %v201 = vrcp.pop %v199
    %v202 = vmul.f32 1.0, %v201
    %v203 = vrcp.pop %v200
    %v204 = vmul.f32 1.0, %v203
    %205 = vst [vmem:[%s4] sm:$0xff] %v202
    %206 = vst [vmem:[%s4 + $0x8] sm:$0xff] %v204
  $region25: #{one_gnn_forward.5} parent=0 // pred_fallthru
    _
  // Predicated region
  $region26: #{one_gnn_forward.5} parent=0 // pred_check
    _
  $region27: #{one_gnn_forward.5} parent=0 // pred_check_branch
    %208 = sbr.rel (0) target = $region29
  $region28: #{one_gnn_forward.5} parent=0 // pred_region
    _
  $region29: #{one_gnn_forward.5} parent=0 // pred_fallthru
    _
  // Predicated region
  $region30: #{one_gnn_forward.5} parent=0 // pred_check
    _
  $region31: #{one_gnn_forward.5} parent=0 // pred_check_branch
    %210 = sbr.rel (0) target = $region33
  $region32: #{one_gnn_forward.5} parent=0 // pred_region
    _
  $region33: #{one_gnn_forward.5} parent=0 // pred_fallthru
    _

// kernel: one_gnn_forward.3
$region0: #{one_gnn_forward.3}
  #allocation0 [shape = 'u32[]', space=smem, size = 0x4, offset = 0x4, fixed_abs, tag = 'smem constant byte address 0x4 - core index']
  #allocation1 [shape = 'u32[144,128]{1,0:T(1,128)}', space=vmem, size = 0x12000, scoped, tag = 'internal scratch']
  #allocation2 [shape = 'f32[16,128]{1,0:T(8,128)}', space=vmem, size = 0x2000, scoped, tag = 'scratch operand']
  %s0 = inlined_call_operand.vmem [shape: bf16[16,16], index: 0, kind: input, shape index: {}]
  %s1 = inlined_call_operand.vmem [shape: bf16[16,128], index: 1, kind: input, shape index: {}]
  %s2 = inlined_call_operand.vmem [shape: f32[128,128], index: 2, kind: input, shape index: {}]
  %s3 = inlined_call_operand.vmem [shape: f32[1,128], index: 3, kind: input, shape index: {}]
  %s4 = inlined_call_operand.vmem [shape: bf16[16,128], index: 4, kind: output, shape index: {}]
  %s5 = sld [smem:[#allocation0]]
  $region34: #{one_gnn_forward.3} parent=0
    _
  %s7 = ssub.s32 1, %s5
  %s8 = scalar_select 0, %s7, %s5
  // Predicated region
  $region2: #{one_gnn_forward.3} parent=0 // pred_check
    _
  $region3: #{one_gnn_forward.3} parent=0 // pred_check_branch
    %10 = sbr.rel (0) target = $region5
  $region4: #{one_gnn_forward.3} parent=0 // pred_region
    _
  $region5: #{one_gnn_forward.3} parent=0 // pred_fallthru
    _
  // Predicated region
  $region6: #{one_gnn_forward.3} parent=0 // pred_check
    _
  $region7: #{one_gnn_forward.3} parent=0 // pred_check_branch
    %12 = sbr.rel (0) target = $region9
  $region8: #{one_gnn_forward.3} parent=0 // pred_region
    _
  $region9: #{one_gnn_forward.3} parent=0 // pred_fallthru
    _
  // Predicated region
  $region10: #{one_gnn_forward.3} parent=0 // pred_check
    _
  $region11: #{one_gnn_forward.3} parent=0 // pred_check_branch
    %14 = sbr.rel (0) target = $region13
  $region12: #{one_gnn_forward.3} parent=0 // pred_region
    _
  $region13: #{one_gnn_forward.3} parent=0 // pred_fallthru
    _
  // Predicated region
  $region14: #{one_gnn_forward.3} parent=0 // pred_check
    _
  $region15: #{one_gnn_forward.3} parent=0 // pred_check_branch
    %16 = sbr.rel (0) target = $region17
  $region16: #{one_gnn_forward.3} parent=0 // pred_region
    _
  $region17: #{one_gnn_forward.3} parent=0 // pred_fallthru
    _
  %p18 = scmp.eq.s32.totalorder 0, 0
  // Predicated region
  $region18: #{one_gnn_forward.3} parent=0 // pred_check
    %p19 = pneg %p18
  $region19: #{one_gnn_forward.3} parent=0 // pred_check_branch
    %21 = sbr.rel (%p19) target = $region21
  $region20: #{one_gnn_forward.3} parent=0 // pred_region
    %22 = vst [vmem:[#allocation2] sm:$0xff] 0.0
    %23 = vst [vmem:[#allocation2 + $0x8] sm:$0xff] 0.0
  $region21: #{one_gnn_forward.3} parent=0 // pred_fallthru
    _
  %v24 = vld [vmem:[#allocation2] sm:$0xff]
  %v25 = vld [vmem:[#allocation2 + $0x8] sm:$0xff]
  %v26 = vld [vmem:[%s0] sm:$0xf]
  %v27 = vld [vmem:[%s0 + $0x4] sm:$0xf]
  %v28 = vld [vmem:[%s1] sm:$0xf]
  %v29 = vld [vmem:[%s1 + $0x4] sm:$0xf]
  %v32 = vunpack.c.l.b16 %v26
  %v33 = vunpack.c.l.b16 %v27
  %v34 = vpack.c.b16 %v33, %v32
  %v37 = vunpack.c.l.b16 %v28
  %v38 = vunpack.c.l.b16 %v29
  %v39 = vpack.c.b16 %v38, %v37
  %vm41 = vcmask 130048
  %v43 = vsel %vm41, %v34, 0
  %45 = vmatprep.subr.bf16.mxu0 0
  %46 = vmatpush1.bf16.msra.mxu0 %v39
  %47 = vmatprep.subr.bf16.mxu0 0
  %48 = vmatpush1.bf16.msra.mxu0 0
  %49 = vmatprep.subr.bf16.mxu0 0
  %50 = vmatpush1.bf16.msra.mxu0 0
  %51 = vmatprep.subr.bf16.mxu0 0
  %52 = vmatpush1.bf16.msra.mxu0 0
  %53 = vmatprep.subr.bf16.mxu0 0
  %54 = vmatpush1.bf16.msra.mxu0 0
  %55 = vmatprep.subr.bf16.mxu0 0
  %56 = vmatpush1.bf16.msra.mxu0 0
  %57 = vmatprep.subr.bf16.mxu0 0
  %58 = vmatpush1.bf16.msra.mxu0 0
  %59 = vmatprep.subr.bf16.mxu0 0
  %60 = vmatpush1.bf16.msra.mxu0 0
  %61 = vmatprep.subr.bf16.mxu0 0
  %62 = vmatpush1.bf16.msra.mxu0 0
  %63 = vmatprep.subr.bf16.mxu0 0
  %64 = vmatpush1.bf16.msra.mxu0 0
  %65 = vmatprep.subr.bf16.mxu0 0
  %66 = vmatpush1.bf16.msra.mxu0 0
  %67 = vmatprep.subr.bf16.mxu0 0
  %68 = vmatpush1.bf16.msra.mxu0 0
  %69 = vmatprep.subr.bf16.mxu0 0
  %70 = vmatpush1.bf16.msra.mxu0 0
  %71 = vmatprep.subr.bf16.mxu0 0
  %72 = vmatpush1.bf16.msra.mxu0 0
  %73 = vmatprep.subr.bf16.mxu0 0
  %74 = vmatpush1.bf16.msra.mxu0 0
  %75 = vmatprep.subr.bf16.mxu0 0
  %76 = vmatpush1.bf16.msra.mxu0 0
  %77 = vmatprep.mubr.bf16.mxu0 0
  %78 = vmatmul.mubr.bf16.gmra.mrb[0].mxu0 %v43
  %v79 = vpop.f32.mrb[0].mxu0
  %v80 = vadd.f32 0.0, %v79
  %v81 = vpop.f32.mrb[0].mxu0
  %v82 = vpop.f32.mrb[0].mxu0
  %v83 = vadd.f32 0.0, %v82
  %v84 = vpop.f32.mrb[0].mxu0
  %85 = vdwg.mxu0
  %v86 = vadd.f32 %v24, %v80
  %v87 = vadd.f32 %v25, %v83
  %88 = vst [vmem:[#allocation2] sm:$0xff] %v86
  %89 = vst [vmem:[#allocation2 + $0x8] sm:$0xff] %v87
  // Predicated region
  $region22: #{one_gnn_forward.3} parent=0 // pred_check
    %p90 = pneg %p18
  $region23: #{one_gnn_forward.3} parent=0 // pred_check_branch
    %92 = sbr.rel (%p90) target = $region25
  $region24: #{one_gnn_forward.3} parent=0 // pred_region
    %v93 = vld [vmem:[#allocation2] sm:$0xff]
    %v94 = vld [vmem:[#allocation2 + $0x8] sm:$0xff]
    %v95 = vld [vmem:[%s2] sm:$0xff]
    %v96 = vld [vmem:[%s2 + $0x8] sm:$0xff]
    %v97 = vld [vmem:[%s2 + $0x10] sm:$0xff]
    %v98 = vld [vmem:[%s2 + $0x18] sm:$0xff]
    %v99 = vld [vmem:[%s2 + $0x20] sm:$0xff]
    %v100 = vld [vmem:[%s2 + $0x28] sm:$0xff]
    %v101 = vld [vmem:[%s2 + $0x30] sm:$0xff]
    %v102 = vld [vmem:[%s2 + $0x38] sm:$0xff]
    %v103 = vld [vmem:[%s2 + $0x40] sm:$0xff]
    %v104 = vld [vmem:[%s2 + $0x48] sm:$0xff]
    %v105 = vld [vmem:[%s2 + $0x50] sm:$0xff]
    %v106 = vld [vmem:[%s2 + $0x58] sm:$0xff]
    %v107 = vld [vmem:[%s2 + $0x60] sm:$0xff]
    %v108 = vld [vmem:[%s2 + $0x68] sm:$0xff]
    %v109 = vld [vmem:[%s2 + $0x70] sm:$0xff]
    %v110 = vld [vmem:[%s2 + $0x78] sm:$0xff]
    %v111 = vld [vmem:[%s3] sm:$0x1]
    %v113 = vlaneseq
    %v114 = vshrl.u32 %v113, 7
    %v115 = vsub.s32 0, %v114
    %v116 = vrot.slane %v111, %v115
    %118 = vmatprep.subr.mxu0 0.0
    %119 = vmatpush1.msra.mxu0 %v95
    %120 = vmatprep.subr.mxu0 0.0
    %121 = vmatpush1.msra.mxu0 %v96
    %122 = vmatprep.subr.mxu0 0.0
    %123 = vmatpush1.msra.mxu0 %v97
    %124 = vmatprep.subr.mxu0 0.0
    %125 = vmatpush1.msra.mxu0 %v98
    %126 = vmatprep.subr.mxu0 0.0
    %127 = vmatpush1.msra.mxu0 %v99
    %128 = vmatprep.subr.mxu0 0.0
    %129 = vmatpush1.msra.mxu0 %v100
    %130 = vmatprep.subr.mxu0 0.0
    %131 = vmatpush1.msra.mxu0 %v101
    %132 = vmatprep.subr.mxu0 0.0
    %133 = vmatpush1.msra.mxu0 %v102
    %134 = vmatprep.subr.mxu0 0.0
    %135 = vmatpush1.msra.mxu0 %v103
    %136 = vmatprep.subr.mxu0 0.0
    %137 = vmatpush1.msra.mxu0 %v104
    %138 = vmatprep.subr.mxu0 0.0
    %139 = vmatpush1.msra.mxu0 %v105
    %140 = vmatprep.subr.mxu0 0.0
    %141 = vmatpush1.msra.mxu0 %v106
    %142 = vmatprep.subr.mxu0 0.0
    %143 = vmatpush1.msra.mxu0 %v107
    %144 = vmatprep.subr.mxu0 0.0
    %145 = vmatpush1.msra.mxu0 %v108
    %146 = vmatprep.subr.mxu0 0.0
    %147 = vmatpush1.msra.mxu0 %v109
    %148 = vmatprep.subr.mxu0 0.0
    %149 = vmatpush1.msra.mxu0 %v110
    %150 = vmatprep.subr.mxu0 0.0
    %151 = vmatpush1.msra.mxu0 0.0
    %152 = vmatprep.subr.mxu0 0.0
    %153 = vmatpush1.msra.mxu0 0.0
    %154 = vmatprep.subr.mxu0 0.0
    %155 = vmatpush1.msra.mxu0 0.0
    %156 = vmatprep.subr.mxu0 0.0
    %157 = vmatpush1.msra.mxu0 0.0
    %158 = vmatprep.subr.mxu0 0.0
    %159 = vmatpush1.msra.mxu0 0.0
    %160 = vmatprep.subr.mxu0 0.0
    %161 = vmatpush1.msra.mxu0 0.0
    %162 = vmatprep.subr.mxu0 0.0
    %163 = vmatpush1.msra.mxu0 0.0
    %164 = vmatprep.subr.mxu0 0.0
    %165 = vmatpush1.msra.mxu0 0.0
    %166 = vmatprep.subr.mxu0 0.0
    %167 = vmatpush1.msra.mxu0 0.0
    %168 = vmatprep.subr.mxu0 0.0
    %169 = vmatpush1.msra.mxu0 0.0
    %170 = vmatprep.subr.mxu0 0.0
    %171 = vmatpush1.msra.mxu0 0.0
    %172 = vmatprep.subr.mxu0 0.0
    %173 = vmatpush1.msra.mxu0 0.0
    %174 = vmatprep.subr.mxu0 0.0
    %175 = vmatpush1.msra.mxu0 0.0
    %176 = vmatprep.subr.mxu0 0.0
    %177 = vmatpush1.msra.mxu0 0.0
    %178 = vmatprep.subr.mxu0 0.0
    %179 = vmatpush1.msra.mxu0 0.0
    %180 = vmatprep.subr.mxu0 0.0
    %181 = vmatpush1.msra.mxu0 0.0
    %182 = vmatprep.mubr.f32.mxu0 0.0
    %183 = vmatmul.mubr.f32.gmra.mrb[0].mxu0 %v93
    %v184 = vpop.f32.mrb[0].mxu0
    %v185 = vadd.f32 %v116, %v184
    %v186 = vpop.f32.mrb[0].mxu0
    %187 = vmatprep.mubr.f32.mxu0 0.0
    %188 = vmatmul.mubr.f32.gmra.mrb[0].mxu0 %v94
    %v189 = vpop.f32.mrb[0].mxu0
    %v190 = vadd.f32 %v116, %v189
    %v191 = vpop.f32.mrb[0].mxu0
    %192 = vdwg.mxu0
    %v193 = vmax.f32 %v185, 0.0
    %v194 = vmax.f32 %v190, 0.0
    %v195 = vpack.c.bf16 %v194, %v193
    %v197 = vunpack.c.l.b16 %v195
    %v198 = vunpack.c.h.b16 %v195
    %v199 = vpack.c.b16 %v197, %v197
    %v200 = vpack.c.b16 %v198, %v198
    %203 = vst [vmem:[%s4] sm:$0xf] %v199
    %204 = vst [vmem:[%s4 + $0x4] sm:$0xf] %v200
  $region25: #{one_gnn_forward.3} parent=0 // pred_fallthru
    _
  // Predicated region
  $region26: #{one_gnn_forward.3} parent=0 // pred_check
    _
  $region27: #{one_gnn_forward.3} parent=0 // pred_check_branch
    %206 = sbr.rel (0) target = $region29
  $region28: #{one_gnn_forward.3} parent=0 // pred_region
    _
  $region29: #{one_gnn_forward.3} parent=0 // pred_fallthru
    _
  // Predicated region
  $region30: #{one_gnn_forward.3} parent=0 // pred_check
    _
  $region31: #{one_gnn_forward.3} parent=0 // pred_check_branch
    %208 = sbr.rel (0) target = $region33
  $region32: #{one_gnn_forward.3} parent=0 // pred_region
    _
  $region33: #{one_gnn_forward.3} parent=0 // pred_fallthru
    _

</llo_original>
